<compile_context>
chip_gen: v7x
topology: tpu7x:2x2x1
jax: 0.10.0
libtpu: 0.0.40
codegen_flags: <defaults>
</compile_context>

<pallas_src>
import math

import jax
import jax.numpy as jnp
from jax.experimental import pallas as pl
from jax.experimental.pallas import tpu as pltpu


_NEG_INF = -1e30


def _vmem_limit():
    try:
        cap = pltpu.get_tpu_info().vmem_capacity_bytes
    except Exception:
        cap = 64 * 1024 * 1024
    return min(96 * 1024 * 1024, int(cap * 3 // 4))


_VMEM_LIMIT = _vmem_limit()


def _fit(dim, tile, gran):
    """Largest `gran`-multiple tile <= `tile` that divides `dim` (full dim if none exists)."""
    if dim <= tile:
        return dim
    t = (tile // gran) * gran
    while t >= gran:
        if dim % t == 0:
            return t
        t -= gran
    return dim


# ------------------------- linear projections (+LN / bias / GELU / residual) ------------------------- #

def _gelu_tanh(y):
    # TODO(synk): torch nn.GELU defaults to exact erf; tanh approximation used here.
    return 0.5 * y * (1.0 + jnp.tanh(0.7978845608028654 * (y + 0.044715 * y * y * y)))


def _make_single_pass_kernel(activation, has_bias, has_ln, has_residual):
    def kernel(*refs):
        it = iter(refs)
        x_ref = next(it)
        w_ref = next(it)
        b_ref = next(it) if has_bias else None
        g_ref = next(it) if has_ln else None
        bt_ref = next(it) if has_ln else None
        r_ref = next(it) if has_residual else None
        o_ref = next(it)

        x = x_ref[...]
        if has_ln:
            xf = x.astype(jnp.float32)
            mu = jnp.mean(xf, axis=-1, keepdims=True)
            xc = xf - mu
            var = jnp.mean(xc * xc, axis=-1, keepdims=True)
            xn = xc * jax.lax.rsqrt(var + 1e-5)
            xn = xn * g_ref[...].astype(jnp.float32) + bt_ref[...].astype(jnp.float32)
            x = xn.astype(x_ref.dtype)                # LN output in activation dtype, as in torch

        y = jnp.dot(x, w_ref[...], preferred_element_type=jnp.float32)   # bf16 operands -> MXU
        if has_bias:
            y = y + b_ref[...].astype(jnp.float32)
        if activation == "gelu":
            y = _gelu_tanh(y)
        if has_residual:
            y = y + r_ref[...].astype(jnp.float32)
        o_ref[...] = y.astype(o_ref.dtype)

    return kernel


def _make_kloop_kernel(activation, has_bias, has_residual):
    def kernel(*refs):
        it = iter(refs)
        x_ref = next(it)
        w_ref = next(it)
        b_ref = next(it) if has_bias else None
        r_ref = next(it) if has_residual else None
        o_ref = next(it)
        acc_ref = next(it)

        @pl.when(pl.program_id(2) == 0)
        def _():
            acc_ref[...] = jnp.zeros_like(acc_ref)

        acc_ref[...] += jnp.dot(x_ref[...], w_ref[...], preferred_element_type=jnp.float32)

        @pl.when(pl.program_id(2) == pl.num_programs(2) - 1)
        def _():
            y = acc_ref[...]
            if has_bias:
                y = y + b_ref[...].astype(jnp.float32)
            if activation == "gelu":
                y = _gelu_tanh(y)
            if has_residual:
                y = y + r_ref[...].astype(jnp.float32)
            o_ref[...] = y.astype(o_ref.dtype)

    return kernel


def _linear(x, w, bias=None, residual=None, activation=None, ln=None,
            tm=512, tn=512, max_single_pass_k=8192):
    """y = act(LN?(x) @ w + bias) (+ residual).   x:(M,K), w:(K,N)."""
    M, K = x.shape
    N = w.shape[1]
    tm = _fit(M, tm, 8)
    tn = _fit(N, tn, 128)
    has_bias = bias is not None
    has_ln = ln is not None
    has_res = residual is not None

    if K <= max_single_pass_k or has_ln:
        # K fits in one block: no K grid axis, no f32 scratch, LN can be fused on the x tile.
        in_specs = [pl.BlockSpec((tm, K), lambda i, j: (i, 0)),
                    pl.BlockSpec((K, tn), lambda i, j: (0, j))]
        args = [x, w]
        if has_bias:
            in_specs.append(pl.BlockSpec((1, tn), lambda i, j: (0, j)))
            args.append(bias)
        if has_ln:
            g, b = ln
            in_specs.append(pl.BlockSpec((1, K), lambda i, j: (0, 0)))
            args.append(g)
            in_specs.append(pl.BlockSpec((1, K), lambda i, j: (0, 0)))
            args.append(b)
        if has_res:
            in_specs.append(pl.BlockSpec((tm, tn), lambda i, j: (i, j)))
            args.append(residual)
        return pl.pallas_call(
            _make_single_pass_kernel(activation, has_bias, has_ln, has_res),
            out_shape=jax.ShapeDtypeStruct((M, N), x.dtype),
            grid=(M // tm, N // tn),
            in_specs=in_specs,
            out_specs=pl.BlockSpec((tm, tn), lambda i, j: (i, j)),
            compiler_params=pltpu.CompilerParams(
                dimension_semantics=("parallel", "parallel"),
                vmem_limit_bytes=_VMEM_LIMIT),
        )(*args)

    # Large K: pipelined reduction over a K grid axis with an f32 VMEM accumulator.
    tk = _fit(K, 2048, 128)
    in_specs = [pl.BlockSpec((tm, tk), lambda i, j, k: (i, k)),
                pl.BlockSpec((tk, tn), lambda i, j, k: (k, j))]
    args = [x, w]
    if has_bias:
        in_specs.append(pl.BlockSpec((1, tn), lambda i, j, k: (0, j)))
        args.append(bias)
    if has_res:
        in_specs.append(pl.BlockSpec((tm, tn), lambda i, j, k: (i, j)))
        args.append(residual)
    return pl.pallas_call(
        _make_kloop_kernel(activation, has_bias, has_res),
        out_shape=jax.ShapeDtypeStruct((M, N), x.dtype),
        grid=(M // tm, N // tn, K // tk),
        in_specs=in_specs,
        out_specs=pl.BlockSpec((tm, tn), lambda i, j, k: (i, j)),
        scratch_shapes=[pltpu.VMEM((tm, tn), jnp.float32)],
        compiler_params=pltpu.CompilerParams(
            dimension_semantics=("parallel", "parallel", "arbitrary"),
            vmem_limit_bytes=_VMEM_LIMIT),
    )(*args)


# ------------------- causal depthwise conv (k=3) + rotary, fused; S-tiled with carry ------------------- #

def _make_dwconv_rope_kernel(n_head, softmax_scale):
    def kernel(x_ref, w_ref, b_ref, cos_ref, sin_ref, q_ref, k_ref, v_ref, carry_ref):
        si = pl.program_id(1)
        x = x_ref[0]                                   # (St, 3D) activation dtype (bf16)
        St, C = x.shape
        D = C // 3
        hd = D // n_head
        half = hd // 2

        @pl.when(si == 0)
        def _():
            carry_ref[...] = jnp.zeros_like(carry_ref)   # causal left-padding for the first tile

        prev = carry_ref[...]                           # (2, C): last two rows of the previous tile
        carry_ref[...] = x[St - 2:St, :]                # carry for the next sequence tile

        xf = x.astype(jnp.float32)
        pf = prev.astype(jnp.float32)
        w = w_ref[...].astype(jnp.float32)              # (3, C)
        b = b_ref[...].astype(jnp.float32)              # (1, C)
        xm1 = jnp.concatenate([pf[1:2, :], xf[:-1, :]], axis=0)
        xm2 = jnp.concatenate([pf, xf[:-2, :]], axis=0)
        # causal depthwise conv (== torch Conv1d(C,C,3,pad=2,groups=C)(x)[..., :-2]):
        #   y[s] = w0*x[s-2] + w1*x[s-1] + w2*x[s] + b
        y = xm2 * w[0:1, :] + xm1 * w[1:2, :] + xf * w[2:3, :] + b

        cos = cos_ref[...]                              # (St, hd//2) f32
        sin = sin_ref[...]

        def rope(t):                                    # non-interleaved rotary over the full head
            t1, t2 = t[:, :half], t[:, half:]
            return jnp.concatenate([t1 * cos - t2 * sin, t2 * cos + t1 * sin], axis=-1)

        for h in range(n_head):                         # unpack heads once per token: (St,D)->(H,St,hd)
            q_ref[0, h] = (rope(y[:, h * hd:(h + 1) * hd]) * softmax_scale).astype(q_ref.dtype)
            k_ref[0, h] = rope(y[:, D + h * hd:D + (h + 1) * hd]).astype(k_ref.dtype)
            v_ref[0, h] = y[:, 2 * D + h * hd:2 * D + (h + 1) * hd].astype(v_ref.dtype)

    return kernel


def _dwconv_rope(qkv, w_dw, b_dw, cos, sin, n_head, softmax_scale, ts=512):
    B, S, C = qkv.shape
    D = C // 3
    hd = D // n_head
    half = hd // 2
    ts = _fit(S, ts, 8)
    out_sds = jax.ShapeDtypeStruct((B, n_head, S, hd), qkv.dtype)
    qkv_spec = pl.BlockSpec((1, n_head, ts, hd), lambda b, s: (b, 0, s, 0))
    return pl.pallas_call(
        _make_dwconv_rope_kernel(n_head, softmax_scale),
        out_shape=(out_sds, out_sds, out_sds),
        grid=(B, S // ts),
        in_specs=[pl.BlockSpec((1, ts, C), lambda b, s: (b, s, 0)),
                  pl.BlockSpec((3, C), lambda b, s: (0, 0)),
                  pl.BlockSpec((1, C), lambda b, s: (0, 0)),
                  pl.BlockSpec((ts, half), lambda b, s: (s, 0)),
                  pl.BlockSpec((ts, half), lambda b, s: (s, 0))],
        out_specs=(qkv_spec, qkv_spec, qkv_spec),
        scratch_shapes=[pltpu.VMEM((2, C), qkv.dtype)],
        compiler_params=pltpu.CompilerParams(
            dimension_semantics=("parallel", "arbitrary"),
            vmem_limit_bytes=_VMEM_LIMIT),
    )(qkv, w_dw, b_dw, cos, sin)


# ---------------------------- causal flash attention (online softmax, batched heads) ---------------------------- #

def _make_flash_kernel(tq, tk):
    def kernel(q_ref, k_ref, v_ref, o_ref, m_sc, l_sc, acc_sc):
        qi = pl.program_id(1)
        ki = pl.program_id(2)

        @pl.when(ki == 0)
        def _():
            m_sc[...] = jnp.full(m_sc.shape, _NEG_INF, jnp.float32)
            l_sc[...] = jnp.zeros(l_sc.shape, jnp.float32)
            acc_sc[...] = jnp.zeros(acc_sc.shape, jnp.float32)

        compute_ok = ki * tk <= qi * tq + (tq - 1)      # block contributes at least one entry
        needs_mask = ki * tk + (tk - 1) > qi * tq       # block straddles the causal diagonal

        def body(masked):
            q = q_ref[0]                                # (H, tq, hd), rotary + 1/sqrt(hd) applied
            k = k_ref[0]                                # (H, tk, hd)
            v = v_ref[0]                                # (H, tk, hd)
            s = jnp.einsum('hqd,hkd->hqk', q, k, preferred_element_type=jnp.float32)
            if masked:
                rows = qi * tq + jax.lax.broadcasted_iota(jnp.int32, (tq, tk), 0)
                cols = ki * tk + jax.lax.broadcasted_iota(jnp.int32, (tq, tk), 1)
                s = jnp.where((cols <= rows)[None, :, :], s, _NEG_INF)
            m_prev = m_sc[...]                          # (H, tq, 1)
            m_new = jnp.maximum(m_prev, jnp.max(s, axis=-1, keepdims=True))
            alpha = jnp.exp(m_prev - m_new)
            p = jnp.exp(s - m_new)                      # (H, tq, tk) f32
            l_sc[...] = alpha * l_sc[...] + jnp.sum(p, axis=-1, keepdims=True)
            acc_sc[...] = alpha * acc_sc[...] + jnp.einsum(
                'hqk,hkd->hqd', p.astype(v.dtype), v, preferred_element_type=jnp.float32)
            m_sc[...] = m_new

        @pl.when(jnp.logical_and(compute_ok, needs_mask))
        def _():
            body(True)

        @pl.when(jnp.logical_and(compute_ok, jnp.logical_not(needs_mask)))
        def _():
            body(False)                                 # fully-below-diagonal: no mask built

        @pl.when(ki == pl.num_programs(2) - 1)
        def _():
            inv_l = pl.reciprocal(l_sc[...], approx=True)        # EUP, not a VALU divide
            o_ref[0] = (acc_sc[...] * inv_l).astype(o_ref.dtype)
            # TODO(synk): attention dropout (config.dropout) skipped — eval-mode semantics.

    return kernel


def _flash_attention(q, k, v, tq=256, tk=256):
    B, H, S, hd = q.shape
    tq = _fit(S, tq, 8)
    tk = _fit(S, tk, 8)

    def kv_index(b, qi, ki):
        # Causally-skipped kv blocks map to the last needed block so their DMA is elided.
        return (b, 0, jnp.minimum(ki, (qi * tq + tq - 1) // tk), 0)

    return pl.pallas_call(
        _make_flash_kernel(tq, tk),
        out_shape=jax.ShapeDtypeStruct((B, H, S, hd), q.dtype),
        grid=(B, S // tq, S // tk),
        in_specs=[pl.BlockSpec((1, H, tq, hd), lambda b, qi, ki: (b, 0, qi, 0)),
                  pl.BlockSpec((1, H, tk, hd), kv_index),
                  pl.BlockSpec((1, H, tk, hd), kv_index)],
        out_specs=pl.BlockSpec((1, H, tq, hd), lambda b, qi, ki: (b, 0, qi, 0)),
        scratch_shapes=[pltpu.VMEM((H, tq, 1), jnp.float32),
                        pltpu.VMEM((H, tq, 1), jnp.float32),
                        pltpu.VMEM((H, tq, hd), jnp.float32)],
        compiler_params=pltpu.CompilerParams(
            dimension_semantics=("parallel", "parallel", "arbitrary"),
            vmem_limit_bytes=_VMEM_LIMIT),
    )(q, k, v)


# ----------------------- out_proj with the head merge folded into the contraction ----------------------- #

def _make_out_proj_kernel(n_head):
    def kernel(x_ref, w_ref, b_ref, r_ref, o_ref):
        acc = jnp.zeros(o_ref.shape[1:], jnp.float32)
        for h in range(n_head):                          # K = D contracted in H chunks of hd
            acc = acc + jnp.dot(x_ref[0, h], w_ref[h], preferred_element_type=jnp.float32)
        y = acc + b_ref[...].astype(jnp.float32) + r_ref[0].astype(jnp.float32)
        o_ref[0] = y.astype(o_ref.dtype)

    return kernel


def _attn_out_proj(ctx, w_out, b_out, residual, tm=512, tn=512):
    """residual + ctx @ Wout, ctx is (B,H,S,hd); the (H,hd)->D merge happens inside the matmul."""
    B, H, S, hd = ctx.shape
    D = w_out.shape[-1]
    w_h = w_out.reshape(H, hd, D)                        # contiguous view, no data movement
    tm = _fit(S, tm, 8)
    tn = _fit(D, tn, 128)
    return pl.pallas_call(
        _make_out_proj_kernel(H),
        out_shape=jax.ShapeDtypeStruct((B, S, D), residual.dtype),
        grid=(B, S // tm, D // tn),
        in_specs=[pl.BlockSpec((1, H, tm, hd), lambda b, i, j: (b, 0, i, 0)),
                  pl.BlockSpec((H, hd, tn), lambda b, i, j: (0, 0, j)),
                  pl.BlockSpec((1, tn), lambda b, i, j: (0, j)),
                  pl.BlockSpec((1, tm, tn), lambda b, i, j: (b, i, j))],
        out_specs=pl.BlockSpec((1, tm, tn), lambda b, i, j: (b, i, j)),
        compiler_params=pltpu.CompilerParams(
            dimension_semantics=("parallel", "parallel", "parallel"),
            vmem_limit_bytes=_VMEM_LIMIT),
    )(ctx, w_h, b_out, residual)


# ----------------------------------------- module forward ----------------------------------------- #

def _mha_block(lp, x, pos_emb, cos, sin, n_head):
    """x + FlashMultiHeadAttention(x + pos_emb), residual fused into out_proj."""
    B, S, D = x.shape
    hd = D // n_head
    xp = (x + pos_emb).reshape(B * S, D)                                 # x = x + pos_emb
    qkv = _linear(xp, lp["w_qkv"], bias=lp["b_qkv"])                     # (B*S, 3D)
    q, k, v = _dwconv_rope(qkv.reshape(B, S, 3 * D), lp["w_dw"], lp["b_dw"],
                           cos, sin, n_head, 1.0 / math.sqrt(hd))        # (B, H, S, hd) each
    ctx = _flash_attention(q, k, v)                                      # (B, H, S, hd)
    return _attn_out_proj(ctx, lp["w_out"], lp["b_out"], x)              # x + attn(x), (B, S, D)


def _block_forward(lp, x, pos_emb, cos, sin, n_head):
    B, S, D = x.shape
    x = _mha_block(lp, x, pos_emb, cos, sin, n_head)                     # x = x + sa(x, pos_emb)
    x2d = x.reshape(B * S, D)
    # ffwd: LayerNorm fused into fc1 (single-pass K), GELU fused, residual fused into fc2.
    # TODO(synk): GeluFeedForward assumed Linear->GELU->Linear (bias=False), dropout skipped.
    h = _linear(x2d, lp["w_fc1"], activation="gelu", ln=(lp["ln_g"], lp["ln_b"]))
    out = _linear(h, lp["w_fc2"], residual=x2d)
    return out.reshape(B, S, D)                                          # x = x + ffwd(ln2(x))


def block_sequence_forward(params, x, pos_emb, pos_dist_emb=None):
    """BlockSequence.forward.  pos_dist_emb accepted but unused (as in the torch module)."""
    B, S, D = x.shape
    n_head = params["n_head"]
    hd = D // n_head
    # Rotary cos/sin table (base 10000, non-interleaved, rotary_dim == head_size), shared by all layers.
    inv_freq = 1.0 / (10000.0 ** (jnp.arange(0, hd, 2, dtype=jnp.float32) / hd))
    freqs = jnp.outer(jnp.arange(S, dtype=jnp.float32), inv_freq)        # (S, hd//2)
    cos = jnp.cos(freqs)
    sin = jnp.sin(freqs)
    for lp in params["layers"]:
        x = _block_forward(lp, x, pos_emb, cos, sin, n_head)
    return x


def init_params(key, n_embed, n_head, hidden_size, n_layer, dtype=jnp.bfloat16):
    """Deterministic synthetic parameters matching the torch module's shapes."""
    D = n_embed
    s = 0.02
    layers = []
    for _ in range(n_layer):
        key, *ks = jax.random.split(key, 9)
        layers.append({
            "w_qkv": (s * jax.random.normal(ks[0], (D, 3 * D))).astype(dtype),     # Wqkv [in, 3D]
            "b_qkv": (s * jax.random.normal(ks[1], (1, 3 * D))).astype(dtype),
            "w_dw":  (s * jax.random.normal(ks[2], (3, 3 * D))).astype(dtype),     # dwconv taps [3, C]
            "b_dw":  (s * jax.random.normal(ks[3], (1, 3 * D))).astype(dtype),
            "w_out": (s * jax.random.normal(ks[4], (D, D))).astype(dtype),         # out_proj [in, out]
            "b_out": (s * jax.random.normal(ks[5], (1, D))).astype(dtype),
            "ln_g":  jnp.ones((1, D), dtype),
            "ln_b":  jnp.zeros((1, D), dtype),
            "w_fc1": (s * jax.random.normal(ks[6], (D, hidden_size))).astype(dtype),
            "w_fc2": (s * jax.random.normal(ks[7], (hidden_size, D))).astype(dtype),
        })
    return {"n_head": n_head, "layers": layers}


if __name__ == "__main__":
    key = jax.random.PRNGKey(0)
    B, S, D, H = 2, 8, 32, 4          # batch, seq, n_embed, n_head  (head_size = 8)
    hidden, n_layer = 64, 2
    kx, kp, kw = jax.random.split(key, 3)

    x = jax.random.normal(kx, (B, S, D), dtype=jnp.float32).astype(jnp.bfloat16)
    pos_emb = jax.random.normal(kp, (1, S, D), dtype=jnp.float32).astype(jnp.bfloat16)
    pos_dist_emb = jnp.zeros((S, S, D), dtype=jnp.bfloat16)              # unused by forward (as in torch)

    params = init_params(kw, D, H, hidden, n_layer)

    out = block_sequence_forward(params, x, pos_emb, pos_dist_emb)
    out = jax.block_until_ready(out)

    assert out.shape == (B, S, D) and out.dtype == jnp.bfloat16
    print("KERNEL_OK")
</pallas_src>

<mosaic_0001>
module attributes {stable_mosaic.version = 11 : i64} {
  func.func @kernel(%arg0: i32, %arg1: i32, %arg2: memref<16x32xbf16, #tpu.memory_space<vmem>>, %arg3: memref<32x96xbf16, #tpu.memory_space<vmem>>, %arg4: memref<1x96xbf16, #tpu.memory_space<vmem>>, %arg5: memref<16x96xbf16, #tpu.memory_space<vmem>>) attributes {dimension_semantics = [#tpu.dimension_semantics<parallel>, #tpu.dimension_semantics<parallel>], iteration_bounds = array<i64: 1, 1>, scalar_prefetch = 0 : i64, scratch_operands = 0 : i64, tpu.core_type = #tpu.core_type<tc>, window_params = [{transform_indices = @transform_0, window_bounds = array<i64: 16, 32>}, {transform_indices = @transform_1, window_bounds = array<i64: 32, 96>}, {transform_indices = @transform_2, window_bounds = array<i64: 1, 96>}, {transform_indices = @transform_3, window_bounds = array<i64: 16, 96>}]} {
    %c0 = arith.constant 0 : index
    %c0_0 = arith.constant 0 : index
    %0 = vector.load %arg2[%c0, %c0_0] : memref<16x32xbf16, #tpu.memory_space<vmem>>, vector<16x32xbf16>
    %c0_1 = arith.constant 0 : index
    %c0_2 = arith.constant 0 : index
    %1 = vector.load %arg3[%c0_1, %c0_2] : memref<32x96xbf16, #tpu.memory_space<vmem>>, vector<32x96xbf16>
    %cst = arith.constant dense<0.000000e+00> : vector<16x96xf32>
    %2 = tpu.matmul %0, %1, %cst {dimension_numbers = #tpu.dot_dimension_numbers<[1], [0], [0], [1], [0, 0, 1, 1], [], []>} : vector<16x32xbf16>, vector<32x96xbf16>, vector<16x96xf32> -> vector<16x96xf32>
    %c0_3 = arith.constant 0 : index
    %c0_4 = arith.constant 0 : index
    %3 = vector.load %arg4[%c0_3, %c0_4] : memref<1x96xbf16, #tpu.memory_space<vmem>>, vector<1x96xbf16>
    %4 = arith.extf %3 : vector<1x96xbf16> to vector<1x96xf32>
    %5 = vector.broadcast %4 : vector<1x96xf32> to vector<16x96xf32>
    %6 = arith.addf %2, %5 : vector<16x96xf32>
    %7 = arith.truncf %6 : vector<16x96xf32> to vector<16x96xbf16>
    %c0_5 = arith.constant 0 : index
    %c0_6 = arith.constant 0 : index
    %8 = vector.load %arg5[%c0_5, %c0_6] : memref<16x96xbf16, #tpu.memory_space<vmem>>, vector<16x96xbf16>
    tpu.vector_store %arg5[%c0_5, %c0_6], %7 {strides = array<i32>} : memref<16x96xbf16, #tpu.memory_space<vmem>>, vector<16x96xbf16>,
    return
  }
  func.func @transform_0(%arg0: i32, %arg1: i32) -> (i32, i32) {
    %c0_i32 = arith.constant 0 : i32
    %c0_i32_0 = arith.constant 0 : i32
    return %arg0, %c0_i32 : i32, i32
  }
  func.func @transform_1(%arg0: i32, %arg1: i32) -> (i32, i32) {
    %c0_i32 = arith.constant 0 : i32
    %c0_i32_0 = arith.constant 0 : i32
    return %c0_i32, %arg1 : i32, i32
  }
  func.func @transform_2(%arg0: i32, %arg1: i32) -> (i32, i32) {
    %c0_i32 = arith.constant 0 : i32
    %c0_i32_0 = arith.constant 0 : i32
    return %c0_i32, %arg1 : i32, i32
  }
  func.func @transform_3(%arg0: i32, %arg1: i32) -> (i32, i32) {
    %c0_i32 = arith.constant 0 : i32
    return %arg0, %arg1 : i32, i32
  }
}

</mosaic_0001>

<llo_original>
// kernel: tpu_custom_call.1
$region0: #{tpu_custom_call.1}
  #allocation0 [shape = 'u32[]', space=smem, size = 0x4, offset = 0x4, fixed_abs, tag = 'smem constant byte address 0x4 - core index']
  #allocation1 [shape = 'u32[144,128]{1,0:T(1,128)}', space=vmem, size = 0x12000, scoped, tag = 'internal scratch']
  %s0 = inlined_call_operand.hbm [shape: bf16[16,32], index: 0, kind: input, shape index: {}]
  %s1 = inlined_call_operand.hbm [shape: bf16[32,96], index: 1, kind: input, shape index: {}]
  %s2 = inlined_call_operand.vmem [shape: bf16[1,96], index: 2, kind: input, shape index: {}]
  %s3 = inlined_call_operand.hbm [shape: bf16[16,96], index: 3, kind: output, shape index: {}]
  %s4 = sld [smem:[#allocation0]]
  $region30: #{tpu_custom_call.1} parent=0
    _
  %s6 = ssub.s32 1, %s4
  %s7 = scalar_select 0, %s6, %s4
  $region1: #{tpu_custom_call.1} parent=0
    #allocation2 [shape = 'u8[4096]{0}', space=vmem, size = 0x1000, scoped, tag = 'input window, operand 0, single buffered']
    #allocation3 [shape = 's32[1]{0}', space=sflag, size = 0x4, scoped, tag = 'scoped memory for tpu_custom_call.1']
    #allocation4 [shape = 's32[1]{0}', space=sflag, size = 0x4, scoped, tag = 'scoped memory for tpu_custom_call.1']
    #allocation5 [shape = 'u8[8192]{0}', space=vmem, size = 0x2000, scoped, tag = 'input window, operand 1, single buffered']
    #allocation6 [shape = 's32[1]{0}', space=sflag, size = 0x4, scoped, tag = 'scoped memory for tpu_custom_call.1']
    #allocation7 [shape = 'u8[4096]{0}', space=vmem, size = 0x1000, scoped, tag = 'output window, operand 0, single buffered']
    %8 = vsyncpa [#allocation3], 0
    %9 = vsyncpa [#allocation6], 0
    %10 = vsyncpa [#allocation4], 0
    // Predicated region
    $region2: #{tpu_custom_call.1} parent=1 // pred_check
      _
    $region3: #{tpu_custom_call.1} parent=1 // pred_check_branch
      %12 = sbr.rel (0) target = $region5
    $region4: #{tpu_custom_call.1} parent=1 // pred_region
      %s14 = ssub.s32 128, 128
      %15 = vsyncadd [#allocation3], %s14
      %s16 = sshll.u32 [#allocation2], 4
      %s17 = int_to_ptr.vmem [resolvable:$true] %s16
      %22 = dma.hbm_to_vmem [thread:$0]  %s0, 128, %s17, [#allocation3], 64, 64, 4
    $region5: #{tpu_custom_call.1} parent=1 // pred_fallthru
      _
    // Predicated region
    $region6: #{tpu_custom_call.1} parent=1 // pred_check
      _
    $region7: #{tpu_custom_call.1} parent=1 // pred_check_branch
      %24 = sbr.rel (0) target = $region9
    $region8: #{tpu_custom_call.1} parent=1 // pred_region
      %s26 = ssub.s32 256, 256
      %27 = vsyncadd [#allocation6], %s26
      %s28 = sshll.u32 [#allocation5], 4
      %s29 = int_to_ptr.vmem [resolvable:$true] %s28
      %34 = dma.hbm_to_vmem [thread:$0]  %s1, 256, %s29, [#allocation6], 64, 64, 4
    $region9: #{tpu_custom_call.1} parent=1 // pred_fallthru
      _
    // Predicated region
    $region10: #{tpu_custom_call.1} parent=1 // pred_check
      _
    $region11: #{tpu_custom_call.1} parent=1 // pred_check_branch
      %36 = sbr.rel (0) target = $region13
    $region12: #{tpu_custom_call.1} parent=1 // pred_region
      _
    $region13: #{tpu_custom_call.1} parent=1 // pred_fallthru
      _
    // Predicated region
    $region14: #{tpu_custom_call.1} parent=1 // pred_check
      _
    $region15: #{tpu_custom_call.1} parent=1 // pred_check_branch
      %38 = sbr.rel (0) target = $region17
    $region16: #{tpu_custom_call.1} parent=1 // pred_region
      %39 = dma.done [#allocation3], 128
    $region17: #{tpu_custom_call.1} parent=1 // pred_fallthru
      _
    // Predicated region
    $region18: #{tpu_custom_call.1} parent=1 // pred_check
      _
    $region19: #{tpu_custom_call.1} parent=1 // pred_check_branch
      %41 = sbr.rel (0) target = $region21
    $region20: #{tpu_custom_call.1} parent=1 // pred_region
      %42 = dma.done [#allocation6], 256
    $region21: #{tpu_custom_call.1} parent=1 // pred_fallthru
      _
    %v44 = vld [vmem:[#allocation2] sm:$0xf]
    %v45 = vld [vmem:[#allocation2 + $0x4] sm:$0xf]
    %v46 = vld [vmem:[#allocation5] sm:$0xf]
    %v47 = vld [vmem:[#allocation5 + $0x4] sm:$0xf]
    %v48 = vld [vmem:[#allocation5 + $0x8] sm:$0xf]
    %v49 = vld [vmem:[#allocation5 + $0xc] sm:$0xf]
    %v50 = vld [vmem:[%s2] sm:$0x1]
    %v51 = vunpack.c.l.bf16 %v50
    %v52 = vlaneseq
    %v53 = vshrl.u32 %v52, 7
    %v54 = vsub.s32 0, %v53
    %v55 = vrot.slane %v51, %v54
    %v58 = vunpack.c.l.b16 %v44
    %v59 = vunpack.c.l.b16 %v45
    %v60 = vpack.c.b16 %v59, %v58
    %v65 = vunpack.c.l.b16 %v46
    %v66 = vunpack.c.l.b16 %v47
    %v67 = vunpack.c.l.b16 %v48
    %v68 = vunpack.c.l.b16 %v49
    %v69 = vpack.c.b16 %v66, %v65
    %v70 = vpack.c.b16 %v68, %v67
    %vm73 = vcmask 261120
    %v75 = vsel %vm73, %v60, 0
    %77 = vmatprep.subr.bf16.mxu0 0
    %78 = vmatpush1.bf16.msra.mxu0 %v69
    %79 = vmatprep.subr.bf16.mxu0 0
    %80 = vmatpush1.bf16.msra.mxu0 %v70
    %81 = vmatprep.subr.bf16.mxu0 0
    %82 = vmatpush1.bf16.msra.mxu0 0
    %83 = vmatprep.subr.bf16.mxu0 0
    %84 = vmatpush1.bf16.msra.mxu0 0
    %85 = vmatprep.subr.bf16.mxu0 0
    %86 = vmatpush1.bf16.msra.mxu0 0
    %87 = vmatprep.subr.bf16.mxu0 0
    %88 = vmatpush1.bf16.msra.mxu0 0
    %89 = vmatprep.subr.bf16.mxu0 0
    %90 = vmatpush1.bf16.msra.mxu0 0
    %91 = vmatprep.subr.bf16.mxu0 0
    %92 = vmatpush1.bf16.msra.mxu0 0
    %93 = vmatprep.subr.bf16.mxu0 0
    %94 = vmatpush1.bf16.msra.mxu0 0
    %95 = vmatprep.subr.bf16.mxu0 0
    %96 = vmatpush1.bf16.msra.mxu0 0
    %97 = vmatprep.subr.bf16.mxu0 0
    %98 = vmatpush1.bf16.msra.mxu0 0
    %99 = vmatprep.subr.bf16.mxu0 0
    %100 = vmatpush1.bf16.msra.mxu0 0
    %101 = vmatprep.subr.bf16.mxu0 0
    %102 = vmatpush1.bf16.msra.mxu0 0
    %103 = vmatprep.subr.bf16.mxu0 0
    %104 = vmatpush1.bf16.msra.mxu0 0
    %105 = vmatprep.subr.bf16.mxu0 0
    %106 = vmatpush1.bf16.msra.mxu0 0
    %107 = vmatprep.subr.bf16.mxu0 0
    %108 = vmatpush1.bf16.msra.mxu0 0
    %109 = vmatprep.mubr.bf16.mxu0 0
    %110 = vmatmul.mubr.bf16.gmra.mrb[0].mxu0 %v75
    %v111 = vpop.f32.mrb[0].mxu0
    %v112 = vadd.f32 %v55, %v111
    %v113 = vpop.f32.mrb[0].mxu0
    %v114 = vpop.f32.mrb[0].mxu0
    %v115 = vadd.f32 %v55, %v114
    %v116 = vpop.f32.mrb[0].mxu0
    %117 = vdwg.mxu0
    %v118 = vpack.c.bf16 %v115, %v112
    %v120 = vunpack.c.l.b16 %v118
    %v121 = vunpack.c.h.b16 %v118
    %v122 = vpack.c.b16 %v120, %v120
    %v123 = vpack.c.b16 %v121, %v121
    %vm126 = vcmask 781312
    %127 = vst.msk [vmem:[#allocation7] sm:$0xf] %vm126, %v122
    %128 = vst.msk [vmem:[#allocation7 + $0x4] sm:$0xf] %vm126, %v123
    // Predicated region
    $region22: #{tpu_custom_call.1} parent=1 // pred_check
      _
    $region23: #{tpu_custom_call.1} parent=1 // pred_check_branch
      %130 = sbr.rel (0) target = $region25
    $region24: #{tpu_custom_call.1} parent=1 // pred_region
      %s132 = ssub.s32 128, 128
      %133 = vsyncadd [#allocation4], %s132
      %s134 = sshll.u32 [#allocation7], 4
      %s135 = int_to_ptr.vmem [resolvable:$true] %s134
      %140 = dma.vmem_to_hbm [thread:$0]  %s135, 128, %s3, [#allocation4], 64, 64, 4
    $region25: #{tpu_custom_call.1} parent=1 // pred_fallthru
      _
    // Predicated region
    $region26: #{tpu_custom_call.1} parent=1 // pred_check
      _
    $region27: #{tpu_custom_call.1} parent=1 // pred_check_branch
      %142 = sbr.rel (0) target = $region29
    $region28: #{tpu_custom_call.1} parent=1 // pred_region
      %143 = dma.done [#allocation4], 128
    $region29: #{tpu_custom_call.1} parent=1 // pred_fallthru
      _
    %144 = vsyncpa [#allocation3], 1
    %145 = vsyncpa [#allocation6], 1
    %146 = vsyncpa [#allocation4], 1

</llo_original>
